<compile_context>
chip_gen: v5e
topology: v5e:2x2
jax: 0.10.0
libtpu: 0.0.40
codegen_flags: <defaults>
</compile_context>

<pallas_src>
import jax
import jax.numpy as jnp
from jax import lax
from jax.experimental import pallas as pl
from jax.experimental.pallas import tpu as pltpu

_LANES = 128


def _round_up(v: int, m: int) -> int:
    return ((v + m - 1) // m) * m


def _chip_config():
    """(num_parallel_halves, max_block_rows_f32) per TPU generation."""
    try:
        kind = jax.devices()[0].device_kind.lower()
    except Exception:  # pragma: no cover - defensive
        kind = ""
    if "v7" in kind:
        # 2 TensorCores/chip, each with its own ~3.2 TB/s HBM path.
        # 4 MiB/input block -> 16 MiB double-buffered per TC (< 32 MiB scoped).
        return 2, 8192
    if "v6" in kind:
        # Single TC; 4 MiB blocks fit the 32 MiB default scoped VMEM.
        return 1, 8192
    # v5e / unknown: 2 MiB blocks (8 MiB double-buffered) fit the 16 MiB
    # default scoped VMEM without touching vmem_limit_bytes.
    return 1, 4096


def _dice_bce_kernel(nrows_ref, x_ref, t_ref, o_ref, inter_acc, xt_acc, bce_acc):
    i = pl.program_id(1)  # reduction axis (inner); axis 0 is the parallel half

    @pl.when(i == 0)
    def _():
        inter_acc[...] = jnp.zeros_like(inter_acc)
        xt_acc[...] = jnp.zeros_like(xt_acc)
        bce_acc[...] = jnp.zeros_like(bce_acc)

    # Row-level validity mask.  The last block of each half may extend past
    # the true row count (grid covers ceil(rows/block)); its OOB rows contain
    # unspecified VMEM data, so BOTH x and t are zeroed before any math.  A
    # zeroed element contributes exactly 0 to every partial sum:
    #   x*t = 0, x+t = 0, BCE = -(0*(-100 - 0) + log(1)) = 0.
    block_rows = x_ref.shape[0]
    start_row = (pl.program_id(0) * pl.num_programs(1) + i) * block_rows
    row_ids = lax.broadcasted_iota(jnp.int32, (block_rows, 1), 0) + start_row
    valid = row_ids < nrows_ref[0]

    x = jnp.where(valid, x_ref[...].astype(jnp.float32), 0.0)
    t = jnp.where(valid, t_ref[...].astype(jnp.float32), 0.0)

    # Per-lane partial sums; the single cross-lane reduce happens in the
    # wrapper so per-step work stays on the VPU/EUP and hides under DMA.
    inter_acc[...] += jnp.sum(x * t, axis=0, keepdims=True)
    xt_acc[...] += jnp.sum(x + t, axis=0, keepdims=True)

    # binary_cross_entropy semantics: -(t*log(p) + (1-t)*log(1-p)), logs
    # clamped at -100 (matches PyTorch), refactored to save a mul+add:
    #   -(t*(log_p - log_1mp) + log_1mp)
    log_p = jnp.maximum(jnp.log(x), -100.0)
    log_1mp = jnp.maximum(jnp.log(1.0 - x), -100.0)
    bce = -(t * (log_p - log_1mp) + log_1mp)
    bce_acc[...] += jnp.sum(bce, axis=0, keepdims=True)

    @pl.when(i == pl.num_programs(1) - 1)
    def _():
        # Emit this half's per-lane partials: rows = [inter, sum(x)+sum(t), bce].
        o_ref[0, 0:1, :] = inter_acc[...]
        o_ref[0, 1:2, :] = xt_acc[...]
        o_ref[0, 2:3, :] = bce_acc[...]


def dice_bce_loss(inputs: jax.Array, targets: jax.Array, smooth: float = 1.0) -> jax.Array:
    """Pallas TPU implementation of DiceBCELoss.forward. Returns a scalar f32."""
    x = inputs.reshape(-1)
    t = targets.reshape(-1)
    n = x.shape[0]

    # Zero-copy path whenever n is lane-aligned (the common case); otherwise a
    # tiny pad to the next multiple of 128 (the padded zeros contribute 0).
    # TODO(synk): a manual-DMA (pl.ANY) path could avoid this copy for
    # lane-unaligned n as well.
    rem = n % _LANES
    if rem:
        x = jnp.pad(x, (0, _LANES - rem))
        t = jnp.pad(t, (0, _LANES - rem))
    rows = x.shape[0] // _LANES
    x2 = x.reshape(rows, _LANES)
    t2 = t.reshape(rows, _LANES)

    splits, max_block_rows = _chip_config()
    if rows < 64:
        splits = 1  # too small to be worth splitting across TensorCores

    # bf16/fp16 inputs pass through un-cast (kernel upcasts per tile); their
    # sublane tile is (16, 128) so round block rows to 16 for narrow dtypes.
    align = 8 if x2.dtype.itemsize >= 4 else 16
    rows_per_split = pl.cdiv(rows, splits)
    block_rows = min(max_block_rows, _round_up(rows_per_split, align))
    if splits == 1 and block_rows > rows:
        block_rows = rows  # single full-extent block (equals full array dim)
    steps = pl.cdiv(rows_per_split, block_rows)

    block = (block_rows, _LANES)
    in_idx = lambda c, i, nrows: (c * steps + i, 0)  # noqa: E731 (steps static)

    partials = pl.pallas_call(
        _dice_bce_kernel,
        out_shape=jax.ShapeDtypeStruct((splits, 3, _LANES), jnp.float32),
        grid_spec=pltpu.PrefetchScalarGridSpec(
            num_scalar_prefetch=1,          # true row count -> SMEM
            grid=(splits, steps),
            in_specs=[
                pl.BlockSpec(block, in_idx),
                pl.BlockSpec(block, in_idx),
            ],
            out_specs=pl.BlockSpec((1, 3, _LANES), lambda c, i, nrows: (c, 0, 0)),
            scratch_shapes=[
                pltpu.VMEM((1, _LANES), jnp.float32),  # per-lane intersection
                pltpu.VMEM((1, _LANES), jnp.float32),  # per-lane sum(x)+sum(t)
                pltpu.VMEM((1, _LANES), jnp.float32),  # per-lane BCE sum
            ],
        ),
        # On v7x the size-2 leading axis should land one half per TensorCore;
        # if xprof shows only one TC active, switch to pltpu.CORE_PARALLEL.
        compiler_params=pltpu.CompilerParams(
            dimension_semantics=("parallel", "arbitrary")),
    )(jnp.array([rows], jnp.int32), x2, t2)

    # Tiny final combine of the halves' per-lane partials (plain XLA).
    sums = jnp.sum(partials, axis=(0, 2))  # (3,) = [intersection, x+t sum, bce sum]
    inter, xt_sum, bce_sum = sums[0], sums[1], sums[2]
    dice_loss = 1.0 - (2.0 * inter + smooth) / (xt_sum + smooth)
    bce_mean = bce_sum / float(max(n, 1))
    return bce_mean + dice_loss


def _reference(inputs, targets, smooth=1.0):
    x = inputs.reshape(-1).astype(jnp.float32)
    t = targets.reshape(-1).astype(jnp.float32)
    inter = jnp.sum(x * t)
    dice = 1.0 - (2.0 * inter + smooth) / (jnp.sum(x) + jnp.sum(t) + smooth)
    bce = jnp.mean(-(t * jnp.maximum(jnp.log(x), -100.0)
                     + (1.0 - t) * jnp.maximum(jnp.log(1.0 - x), -100.0)))
    return bce + dice


if __name__ == "__main__":
    key = jax.random.PRNGKey(0)
    k1, k2 = jax.random.split(key)

    # NCHW, matching the PyTorch module's typical segmentation usage.
    B, C, H, W = 2, 4, 16, 16
    logits = jax.random.normal(k1, (B, C, H, W), dtype=jnp.float32)
    inputs = jax.nn.sigmoid(logits)                                  # probabilities in (0, 1)
    targets = jax.random.bernoulli(k2, 0.5, (B, C, H, W)).astype(jnp.float32)

    loss = dice_bce_loss(inputs, targets, smooth=1.0)
    loss = jax.block_until_ready(loss)

    ref = _reference(inputs, targets, 1.0)
    assert jnp.allclose(loss, ref, rtol=1e-5, atol=1e-5), (loss, ref)

    print("KERNEL_OK")
</pallas_src>

<mosaic_0001>
module attributes {stable_mosaic.version = 11 : i64} {
  func.func @_dice_bce_kernel(%arg0: i32, %arg1: i32, %arg2: memref<1xi32, #tpu.memory_space<smem>>, %arg3: memref<16x128xf32, #tpu.memory_space<vmem>>, %arg4: memref<16x128xf32, #tpu.memory_space<vmem>>, %arg5: memref<1x3x128xf32, #tpu.memory_space<vmem>>, %arg6: memref<1x128xf32, #tpu.memory_space<vmem>>, %arg7: memref<1x128xf32, #tpu.memory_space<vmem>>, %arg8: memref<1x128xf32, #tpu.memory_space<vmem>>) attributes {dimension_semantics = [#tpu.dimension_semantics<parallel>, #tpu.dimension_semantics<arbitrary>], iteration_bounds = array<i64: 1, 1>, scalar_prefetch = 1 : i64, scratch_operands = 3 : i64, tpu.core_type = #tpu.core_type<tc>, window_params = [{transform_indices = @transform_0, window_bounds = array<i64: 16, 128>}, {transform_indices = @transform_1, window_bounds = array<i64: 16, 128>}, {transform_indices = @transform_2, window_bounds = array<i64: 1, 3, 128>}]} {
    %c0_i32 = arith.constant 0 : i32
    %0 = arith.cmpi eq, %arg1, %c0_i32 : i32
    %1 = arith.extui %0 : i1 to i32
    %c0_i32_0 = arith.constant 0 : i32
    %2 = arith.cmpi ne, %1, %c0_i32_0 : i32
    scf.if %2 {
      %cst_27 = arith.constant 0.000000e+00 : f32
      %55 = vector.broadcast %cst_27 : f32 to vector<1x128xf32>
      %c0_28 = arith.constant 0 : index
      %c0_29 = arith.constant 0 : index
      %56 = vector.load %arg6[%c0_28, %c0_29] : memref<1x128xf32, #tpu.memory_space<vmem>>, vector<1x128xf32>
      tpu.vector_store %arg6[%c0_28, %c0_29], %55 {strides = array<i32>} : memref<1x128xf32, #tpu.memory_space<vmem>>, vector<1x128xf32>,
      %cst_30 = arith.constant 0.000000e+00 : f32
      %57 = vector.broadcast %cst_30 : f32 to vector<1x128xf32>
      %c0_31 = arith.constant 0 : index
      %c0_32 = arith.constant 0 : index
      %58 = vector.load %arg7[%c0_31, %c0_32] : memref<1x128xf32, #tpu.memory_space<vmem>>, vector<1x128xf32>
      tpu.vector_store %arg7[%c0_31, %c0_32], %57 {strides = array<i32>} : memref<1x128xf32, #tpu.memory_space<vmem>>, vector<1x128xf32>,
      %cst_33 = arith.constant 0.000000e+00 : f32
      %59 = vector.broadcast %cst_33 : f32 to vector<1x128xf32>
      %c0_34 = arith.constant 0 : index
      %c0_35 = arith.constant 0 : index
      %60 = vector.load %arg8[%c0_34, %c0_35] : memref<1x128xf32, #tpu.memory_space<vmem>>, vector<1x128xf32>
      tpu.vector_store %arg8[%c0_34, %c0_35], %59 {strides = array<i32>} : memref<1x128xf32, #tpu.memory_space<vmem>>, vector<1x128xf32>,
    } else {
    }
    %c1_i32 = arith.constant 1 : i32
    %3 = arith.muli %arg0, %c1_i32 : i32
    %4 = arith.addi %3, %arg1 : i32
    %c16_i32 = arith.constant 16 : i32
    %5 = arith.muli %4, %c16_i32 : i32
    %6 = tpu.iota {dimensions = array<i32: 0>} : vector<16x1xi32>
    %7 = vector.broadcast %5 : i32 to vector<16x1xi32>
    %8 = arith.addi %6, %7 : vector<16x1xi32>
    %c0 = arith.constant 0 : index
    %9 = memref.load %arg2[%c0] : memref<1xi32, #tpu.memory_space<smem>>
    %10 = vector.broadcast %9 : i32 to vector<16x1xi32>
    %11 = arith.cmpi slt, %8, %10 : vector<16x1xi32>
    %c0_1 = arith.constant 0 : index
    %c0_2 = arith.constant 0 : index
    %12 = vector.load %arg3[%c0_1, %c0_2] : memref<16x128xf32, #tpu.memory_space<vmem>>, vector<16x128xf32>
    %cst = arith.constant 0.000000e+00 : f32
    %13 = vector.shape_cast %11 : vector<16x1xi1> to vector<16x1xi1>
    %14 = vector.broadcast %13 : vector<16x1xi1> to vector<16x128xi1>
    %15 = vector.broadcast %cst : f32 to vector<16x128xf32>
    %16 = arith.select %14, %12, %15 : vector<16x128xi1>, vector<16x128xf32>
    %c0_3 = arith.constant 0 : index
    %c0_4 = arith.constant 0 : index
    %17 = vector.load %arg4[%c0_3, %c0_4] : memref<16x128xf32, #tpu.memory_space<vmem>>, vector<16x128xf32>
    %cst_5 = arith.constant 0.000000e+00 : f32
    %18 = vector.shape_cast %11 : vector<16x1xi1> to vector<16x1xi1>
    %19 = vector.broadcast %18 : vector<16x1xi1> to vector<16x128xi1>
    %20 = vector.broadcast %cst_5 : f32 to vector<16x128xf32>
    %21 = arith.select %19, %17, %20 : vector<16x128xi1>, vector<16x128xf32>
    %c0_6 = arith.constant 0 : index
    %c0_7 = arith.constant 0 : index
    %22 = vector.load %arg6[%c0_6, %c0_7] : memref<1x128xf32, #tpu.memory_space<vmem>>, vector<1x128xf32>
    %23 = arith.mulf %16, %21 : vector<16x128xf32>
    %cst_8 = arith.constant dense<0.000000e+00> : vector<128xf32>
    %24 = vector.multi_reduction <add>, %23, %cst_8 [0] : vector<16x128xf32> to vector<128xf32>
    %25 = vector.shape_cast %24 : vector<128xf32> to vector<1x128xf32>
    %26 = arith.addf %22, %25 : vector<1x128xf32>
    %c0_9 = arith.constant 0 : index
    %c0_10 = arith.constant 0 : index
    %27 = vector.load %arg6[%c0_9, %c0_10] : memref<1x128xf32, #tpu.memory_space<vmem>>, vector<1x128xf32>
    tpu.vector_store %arg6[%c0_9, %c0_10], %26 {strides = array<i32>} : memref<1x128xf32, #tpu.memory_space<vmem>>, vector<1x128xf32>,
    %c0_11 = arith.constant 0 : index
    %c0_12 = arith.constant 0 : index
    %28 = vector.load %arg7[%c0_11, %c0_12] : memref<1x128xf32, #tpu.memory_space<vmem>>, vector<1x128xf32>
    %29 = arith.addf %16, %21 : vector<16x128xf32>
    %cst_13 = arith.constant dense<0.000000e+00> : vector<128xf32>
    %30 = vector.multi_reduction <add>, %29, %cst_13 [0] : vector<16x128xf32> to vector<128xf32>
    %31 = vector.shape_cast %30 : vector<128xf32> to vector<1x128xf32>
    %32 = arith.addf %28, %31 : vector<1x128xf32>
    %c0_14 = arith.constant 0 : index
    %c0_15 = arith.constant 0 : index
    %33 = vector.load %arg7[%c0_14, %c0_15] : memref<1x128xf32, #tpu.memory_space<vmem>>, vector<1x128xf32>
    tpu.vector_store %arg7[%c0_14, %c0_15], %32 {strides = array<i32>} : memref<1x128xf32, #tpu.memory_space<vmem>>, vector<1x128xf32>,
    %34 = math.log %16 : vector<16x128xf32>
    %cst_16 = arith.constant -1.000000e+02 : f32
    %35 = vector.broadcast %cst_16 : f32 to vector<16x128xf32>
    %36 = arith.maximumf %34, %35 : vector<16x128xf32>
    %cst_17 = arith.constant 1.000000e+00 : f32
    %37 = vector.broadcast %cst_17 : f32 to vector<16x128xf32>
    %38 = arith.subf %37, %16 : vector<16x128xf32>
    %39 = math.log %38 : vector<16x128xf32>
    %cst_18 = arith.constant -1.000000e+02 : f32
    %40 = vector.broadcast %cst_18 : f32 to vector<16x128xf32>
    %41 = arith.maximumf %39, %40 : vector<16x128xf32>
    %42 = arith.subf %36, %41 : vector<16x128xf32>
    %43 = arith.mulf %21, %42 : vector<16x128xf32>
    %44 = arith.addf %43, %41 : vector<16x128xf32>
    %cst_19 = arith.constant 0.000000e+00 : f32
    %45 = vector.broadcast %cst_19 : f32 to vector<16x128xf32>
    %46 = arith.subf %45, %44 : vector<16x128xf32>
    %c0_20 = arith.constant 0 : index
    %c0_21 = arith.constant 0 : index
    %47 = vector.load %arg8[%c0_20, %c0_21] : memref<1x128xf32, #tpu.memory_space<vmem>>, vector<1x128xf32>
    %cst_22 = arith.constant dense<0.000000e+00> : vector<128xf32>
    %48 = vector.multi_reduction <add>, %46, %cst_22 [0] : vector<16x128xf32> to vector<128xf32>
    %49 = vector.shape_cast %48 : vector<128xf32> to vector<1x128xf32>
    %50 = arith.addf %47, %49 : vector<1x128xf32>
    %c0_23 = arith.constant 0 : index
    %c0_24 = arith.constant 0 : index
    %51 = vector.load %arg8[%c0_23, %c0_24] : memref<1x128xf32, #tpu.memory_space<vmem>>, vector<1x128xf32>
    tpu.vector_store %arg8[%c0_23, %c0_24], %50 {strides = array<i32>} : memref<1x128xf32, #tpu.memory_space<vmem>>, vector<1x128xf32>,
    %c0_i32_25 = arith.constant 0 : i32
    %52 = arith.cmpi eq, %arg1, %c0_i32_25 : i32
    %53 = arith.extui %52 : i1 to i32
    %c0_i32_26 = arith.constant 0 : i32
    %54 = arith.cmpi ne, %53, %c0_i32_26 : i32
    scf.if %54 {
      %c0_27 = arith.constant 0 : index
      %c0_28 = arith.constant 0 : index
      %55 = vector.load %arg6[%c0_27, %c0_28] : memref<1x128xf32, #tpu.memory_space<vmem>>, vector<1x128xf32>
      %c0_29 = arith.constant 0 : index
      %c0_30 = arith.constant 0 : index
      %c0_31 = arith.constant 0 : index
      %56 = vector.load %arg5[%c0_29, %c0_30, %c0_31] : memref<1x3x128xf32, #tpu.memory_space<vmem>>, vector<1x1x128xf32>
      %57 = vector.shape_cast %56 : vector<1x1x128xf32> to vector<1x128xf32>
      %58 = vector.shape_cast %55 : vector<1x128xf32> to vector<1x1x128xf32>
      tpu.vector_store %arg5[%c0_29, %c0_30, %c0_31], %58 {strides = array<i32>} : memref<1x3x128xf32, #tpu.memory_space<vmem>>, vector<1x1x128xf32>,
      %c0_32 = arith.constant 0 : index
      %c0_33 = arith.constant 0 : index
      %59 = vector.load %arg7[%c0_32, %c0_33] : memref<1x128xf32, #tpu.memory_space<vmem>>, vector<1x128xf32>
      %c0_34 = arith.constant 0 : index
      %c1 = arith.constant 1 : index
      %c0_35 = arith.constant 0 : index
      %60 = vector.load %arg5[%c0_34, %c1, %c0_35] : memref<1x3x128xf32, #tpu.memory_space<vmem>>, vector<1x1x128xf32>
      %61 = vector.shape_cast %60 : vector<1x1x128xf32> to vector<1x128xf32>
      %62 = vector.shape_cast %59 : vector<1x128xf32> to vector<1x1x128xf32>
      tpu.vector_store %arg5[%c0_34, %c1, %c0_35], %62 {strides = array<i32>} : memref<1x3x128xf32, #tpu.memory_space<vmem>>, vector<1x1x128xf32>,
      %c0_36 = arith.constant 0 : index
      %c0_37 = arith.constant 0 : index
      %63 = vector.load %arg8[%c0_36, %c0_37] : memref<1x128xf32, #tpu.memory_space<vmem>>, vector<1x128xf32>
      %c0_38 = arith.constant 0 : index
      %c2 = arith.constant 2 : index
      %c0_39 = arith.constant 0 : index
      %64 = vector.load %arg5[%c0_38, %c2, %c0_39] : memref<1x3x128xf32, #tpu.memory_space<vmem>>, vector<1x1x128xf32>
      %65 = vector.shape_cast %64 : vector<1x1x128xf32> to vector<1x128xf32>
      %66 = vector.shape_cast %63 : vector<1x128xf32> to vector<1x1x128xf32>
      tpu.vector_store %arg5[%c0_38, %c2, %c0_39], %66 {strides = array<i32>} : memref<1x3x128xf32, #tpu.memory_space<vmem>>, vector<1x1x128xf32>,
    } else {
    }
    return
  }
  func.func @transform_0(%arg0: i32, %arg1: i32, %arg2: memref<1xi32, #tpu.memory_space<smem>>) -> (i32, i32) {
    %c1_i32 = arith.constant 1 : i32
    %0 = arith.muli %arg0, %c1_i32 : i32
    %1 = arith.addi %0, %arg1 : i32
    %c0_i32 = arith.constant 0 : i32
    %c0_i32_0 = arith.constant 0 : i32
    return %1, %c0_i32 : i32, i32
  }
  func.func @transform_1(%arg0: i32, %arg1: i32, %arg2: memref<1xi32, #tpu.memory_space<smem>>) -> (i32, i32) {
    %c1_i32 = arith.constant 1 : i32
    %0 = arith.muli %arg0, %c1_i32 : i32
    %1 = arith.addi %0, %arg1 : i32
    %c0_i32 = arith.constant 0 : i32
    %c0_i32_0 = arith.constant 0 : i32
    return %1, %c0_i32 : i32, i32
  }
  func.func @transform_2(%arg0: i32, %arg1: i32, %arg2: memref<1xi32, #tpu.memory_space<smem>>) -> (i32, i32, i32) {
    %c0_i32 = arith.constant 0 : i32
    %c0_i32_0 = arith.constant 0 : i32
    %c0_i32_1 = arith.constant 0 : i32
    return %arg0, %c0_i32, %c0_i32_0 : i32, i32, i32
  }
}

</mosaic_0001>

<llo_original>
// kernel: tpu_custom_call.1
$region0: #{tpu_custom_call.1}
  #allocation0 [shape = 'u32[]', space=smem, size = 0x4, offset = 0x4, fixed_abs, tag = 'smem constant byte address 0x4 - core index']
  #allocation1 [shape = 'u32[72,128]{1,0:T(1,128)}', space=vmem, size = 0x9000, scoped, tag = 'internal scratch']
  #allocation2 [shape = 'f32[1,128]{1,0:T(1,128)}', space=vmem, size = 0x200, scoped, tag = 'scratch operand']
  #allocation3 [shape = 'f32[1,128]{1,0:T(1,128)}', space=vmem, size = 0x200, scoped, tag = 'scratch operand']
  #allocation4 [shape = 'f32[1,128]{1,0:T(1,128)}', space=vmem, size = 0x200, scoped, tag = 'scratch operand']
  #allocation5 [shape = 's32[1]{0}', space=sflag, size = 0x4, scoped, tag = 'scoped memory for tpu_custom_call.1']
  #allocation6 [shape = 's32[1]{0:T(128)S(6)}', space=smem, size = 0x200, scoped, tag = 'prefetched SMEM operand 0']
  %s0 = inlined_call_operand.<no memory space> [shape: s32[1], index: 0, kind: input, shape index: {}]
  %s1 = inlined_call_operand.hbm [shape: f32[16,128], index: 1, kind: input, shape index: {}]
  %s2 = inlined_call_operand.hbm [shape: f32[16,128], index: 2, kind: input, shape index: {}]
  %s3 = inlined_call_operand.vmem [shape: f32[1,3,128], index: 3, kind: output, shape index: {}]
  %s4 = sld [smem:[#allocation0]]
  $region34: #{tpu_custom_call.1} parent=0
    _
  %s6 = ssub.s32 1, %s4
  %s7 = scalar_select 0, %s6, %s4
  %8 = sst [smem:[#allocation6]] %s0
  $region1: #{tpu_custom_call.1} parent=0
    #allocation7 [shape = 'u8[8192]{0}', space=vmem, size = 0x2000, scoped, tag = 'input window, operand 1, single buffered']
    #allocation8 [shape = 's32[1]{0}', space=sflag, size = 0x4, scoped, tag = 'scoped memory for tpu_custom_call.1']
    #allocation9 [shape = 'u8[8192]{0}', space=vmem, size = 0x2000, scoped, tag = 'input window, operand 2, single buffered']
    #allocation10 [shape = 's32[1]{0}', space=sflag, size = 0x4, scoped, tag = 'scoped memory for tpu_custom_call.1']
    %9 = vsyncpa [#allocation8], 0
    %10 = vsyncpa [#allocation10], 0
    // Predicated region
    $region2: #{tpu_custom_call.1} parent=1 // pred_check
      _
    $region3: #{tpu_custom_call.1} parent=1 // pred_check_branch
      %12 = sbr.rel (0) target = $region5
    $region4: #{tpu_custom_call.1} parent=1 // pred_region
      %s13 = sadd.s32 0, 0
      %s14 = smul.u32 2, %s13
      %16 = vsyncadd [#allocation8], 0
      %s17 = smul.addr %s14, 8
      %s18 = scalar_lea.hbm %s1, %s17
      %s19 = sshll.u32 %s18, 4
      %s20 = int_to_ptr.hbm [resolvable:$true] %s19
      %s21 = sshll.u32 [#allocation7], 4
      %s22 = int_to_ptr.vmem [resolvable:$true] %s21
      %27 = dma.hbm_to_vmem [thread:$0]  %s20, 256, %s22, [#allocation8], 128, 128, 8
    $region5: #{tpu_custom_call.1} parent=1 // pred_fallthru
      _
    // Predicated region
    $region6: #{tpu_custom_call.1} parent=1 // pred_check
      _
    $region7: #{tpu_custom_call.1} parent=1 // pred_check_branch
      %29 = sbr.rel (0) target = $region9
    $region8: #{tpu_custom_call.1} parent=1 // pred_region
      %s30 = sadd.s32 0, 0
      %s31 = smul.u32 2, %s30
      %33 = vsyncadd [#allocation10], 0
      %s34 = smul.addr %s31, 8
      %s35 = scalar_lea.hbm %s2, %s34
      %s36 = sshll.u32 %s35, 4
      %s37 = int_to_ptr.hbm [resolvable:$true] %s36
      %s38 = sshll.u32 [#allocation9], 4
      %s39 = int_to_ptr.vmem [resolvable:$true] %s38
      %44 = dma.hbm_to_vmem [thread:$0]  %s37, 256, %s39, [#allocation10], 128, 128, 8
    $region9: #{tpu_custom_call.1} parent=1 // pred_fallthru
      _
    // Predicated region
    $region10: #{tpu_custom_call.1} parent=1 // pred_check
      _
    $region11: #{tpu_custom_call.1} parent=1 // pred_check_branch
      %46 = sbr.rel (0) target = $region13
    $region12: #{tpu_custom_call.1} parent=1 // pred_region
      %48 = dma.done [#allocation8], 256
    $region13: #{tpu_custom_call.1} parent=1 // pred_fallthru
      _
    // Predicated region
    $region14: #{tpu_custom_call.1} parent=1 // pred_check
      _
    $region15: #{tpu_custom_call.1} parent=1 // pred_check_branch
      %50 = sbr.rel (0) target = $region17
    $region16: #{tpu_custom_call.1} parent=1 // pred_region
      %52 = dma.done [#allocation10], 256
    $region17: #{tpu_custom_call.1} parent=1 // pred_fallthru
      _
    %s53 = sadd.s32 0, 0
    %s54 = smul.u32 2, %s53
    %s55 = sadd.s32 0, 0
    %s56 = smul.u32 2, %s55
    %p57 = scmp.eq.s32.totalorder 0, 0
    // Predicated region
    $region18: #{tpu_custom_call.1} parent=1 // pred_check
      %p58 = pneg %p57
    $region19: #{tpu_custom_call.1} parent=1 // pred_check_branch
      %60 = sbr.rel (%p58) target = $region21
    $region20: #{tpu_custom_call.1} parent=1 // pred_region
      %61 = vst [vmem:[#allocation2] sm:$0x1] 0.0
      %62 = vst [vmem:[#allocation3] sm:$0x1] 0.0
      %63 = vst [vmem:[#allocation4] sm:$0x1] 0.0
    $region21: #{tpu_custom_call.1} parent=1 // pred_fallthru
      _
    %s64 = sadd.s32 0, 0
    %s65 = smul.u32 %s64, 16
    %v66 = vlaneseq
    %v67 = vshrl.u32 %v66, 7
    %v68 = vadd.s32 %v67, 8
    %v69 = vstv %s65
    %v70 = vadd.s32 %v67, %v69
    %v71 = vadd.s32 %v68, %v69
    %s72 = sld [smem:[#allocation6]]
    %v73 = vstv %s72
    %vm74 = vcmp.lt.s32.totalorder %v70, %v73
    %vm75 = vcmp.lt.s32.totalorder %v71, %v73
    %v76 = vld [vmem:[#allocation7] sm:$0xff]
    %v77 = vld [vmem:[#allocation7 + $0x8] sm:$0xff]
    %v78 = vsel %vm74, 1, 0
    %v79 = vsel %vm75, 1, 0
    %vm80 = vcmp.eq.s32.totalorder %v78, 1
    %vm81 = vcmp.eq.s32.totalorder %v79, 1
    %v82 = vsel %vm80, %v76, 0.0
    %v83 = vsel %vm81, %v77, 0.0
    %v84 = vld [vmem:[#allocation9] sm:$0xff]
    %v85 = vld [vmem:[#allocation9 + $0x8] sm:$0xff]
    %v86 = vsel %vm80, %v84, 0.0
    %v87 = vsel %vm81, %v85, 0.0
    %v88 = vld [vmem:[#allocation2] sm:$0x1]
    %v89 = vmul.f32 %v82, %v86
    %v90 = vmul.f32 %v83, %v87
    %v91 = vadd.f32 %v89, %v90
    %v92 = vrot.slane %v91, 4
    %v93 = vadd.f32 %v91, %v92
    %v94 = vrot.slane %v93, 2
    %v95 = vadd.f32 %v93, %v94
    %v96 = vrot.slane %v95, 1
    %v97 = vadd.f32 %v95, %v96
    %v98 = vadd.f32 %v88, %v97
    %99 = vst [vmem:[#allocation2] sm:$0x1] %v98
    %v100 = vld [vmem:[#allocation3] sm:$0x1]
    %v101 = vadd.f32 %v82, %v86
    %v102 = vadd.f32 %v83, %v87
    %v103 = vadd.f32 %v101, %v102
    %v104 = vrot.slane %v103, 4
    %v105 = vadd.f32 %v103, %v104
    %v106 = vrot.slane %v105, 2
    %v107 = vadd.f32 %v105, %v106
    %v108 = vrot.slane %v107, 1
    %v109 = vadd.f32 %v107, %v108
    %v110 = vadd.f32 %v100, %v109
    %111 = vst [vmem:[#allocation3] sm:$0x1] %v110
    %v112 = vlog2.pop %v82
    %v113 = vmul.f32 %v112, 0.6931472
    %v114 = vlog2.pop %v83
    %v115 = vmul.f32 %v114, 0.6931472
    %v116 = vmax.f32 %v113, -100.0
    %v117 = vmax.f32 %v115, -100.0
    %v118 = vsub.f32 1.0, %v82
    %v119 = vsub.f32 1.0, %v83
    %v120 = vlog2.pop %v118
    %v121 = vmul.f32 %v120, 0.6931472
    %v122 = vlog2.pop %v119
    %v123 = vmul.f32 %v122, 0.6931472
    %v124 = vmax.f32 %v121, -100.0
    %v125 = vmax.f32 %v123, -100.0
    %v126 = vsub.f32 %v116, %v124
    %v127 = vsub.f32 %v117, %v125
    %v128 = vmul.f32 %v86, %v126
    %v129 = vmul.f32 %v87, %v127
    %v130 = vadd.f32 %v128, %v124
    %v131 = vadd.f32 %v129, %v125
    %v132 = vsub.f32 0.0, %v130
    %v133 = vsub.f32 0.0, %v131
    %v134 = vld [vmem:[#allocation4] sm:$0x1]
    %v135 = vadd.f32 %v132, %v133
    %v136 = vrot.slane %v135, 4
    %v137 = vadd.f32 %v135, %v136
    %v138 = vrot.slane %v137, 2
    %v139 = vadd.f32 %v137, %v138
    %v140 = vrot.slane %v139, 1
    %v141 = vadd.f32 %v139, %v140
    %v142 = vadd.f32 %v134, %v141
    %143 = vst [vmem:[#allocation4] sm:$0x1] %v142
    // Predicated region
    $region22: #{tpu_custom_call.1} parent=1 // pred_check
      %p144 = pneg %p57
    $region23: #{tpu_custom_call.1} parent=1 // pred_check_branch
      %146 = sbr.rel (%p144) target = $region25
    $region24: #{tpu_custom_call.1} parent=1 // pred_region
      %v147 = vld [vmem:[#allocation2] sm:$0x1]
      %148 = vst [vmem:[%s3] sm:$0x1] %v147
      %v149 = vld [vmem:[#allocation3] sm:$0x1]
      %150 = vst [vmem:[%s3 + $0x1] sm:$0x1] %v149
      %v151 = vld [vmem:[#allocation4] sm:$0x1]
      %152 = vst [vmem:[%s3 + $0x2] sm:$0x1] %v151
    $region25: #{tpu_custom_call.1} parent=1 // pred_fallthru
      _
    // Predicated region
    $region26: #{tpu_custom_call.1} parent=1 // pred_check
      _
    $region27: #{tpu_custom_call.1} parent=1 // pred_check_branch
      %154 = sbr.rel (0) target = $region29
    $region28: #{tpu_custom_call.1} parent=1 // pred_region
      _
    $region29: #{tpu_custom_call.1} parent=1 // pred_fallthru
      _
    // Predicated region
    $region30: #{tpu_custom_call.1} parent=1 // pred_check
      _
    $region31: #{tpu_custom_call.1} parent=1 // pred_check_branch
      %156 = sbr.rel (0) target = $region33
    $region32: #{tpu_custom_call.1} parent=1 // pred_region
      _
    $region33: #{tpu_custom_call.1} parent=1 // pred_fallthru
      _
    %157 = vsyncpa [#allocation8], 1
    %158 = vsyncpa [#allocation10], 1

</llo_original>
